<compile_context>
chip_gen: v7x
topology: tpu7x:2x2x1
jax: 0.10.0
libtpu: 0.0.40
codegen_flags: <defaults>
</compile_context>

<pallas_src>
import jax
import jax.numpy as jnp
from jax import lax
from jax.experimental import pallas as pl
from jax.experimental.pallas import tpu as pltpu


_SUBLANE = 8       # f32 sublane count
_TB_MAX = 8192     # batch-tile rows. VMEM per tile: x block (8192,100->128 lane
                   # padded) f32 = 4 MiB, double-buffered = 8 MiB, + (1,8192)
                   # output blocks ~0.5 MiB.  Fits the *default scoped* VMEM on
                   # all generations (16 MiB v5e, 32 MiB v6e/v7x); we still set
                   # vmem_limit_bytes explicitly below.


def critic_x_kernel(x_ref, w_ref, b_ref, o_ref):
    # x_ref: (tb, S)  f32 VMEM batch tile (S unpadded; lane padding only in VMEM)
    # w_ref: (8, S)   f32 VMEM folded weight; row 0 real, rows 1..7 zero
    # b_ref: (1, 1)   f32 SMEM folded bias scalar
    # o_ref: (1, tb)  f32 VMEM lane-dense output row (batch on the 128-lane axis)
    acc = lax.dot_general(
        w_ref[...], x_ref[...],
        dimension_numbers=(((1,), (1,)), ((), ())),   # contract S: A @ B^T
        preferred_element_type=jnp.float32,
    )                                                 # (8, tb)
    # Only row 0 is real; add the scalar bias and store the lane-dense row.
    o_ref[...] = (acc[0:1, :] + b_ref[0, 0]).astype(o_ref.dtype)


def fold_params(w1, b1, w2, b2):
    """Fold dense1+dense2 once, outside the per-call path.

    PyTorch layout: w1:(20,S) b1:(20,) w2:(1,20) b2:(1,).
    Returns w8:(8,S) (row 0 = folded weight, rows 1..7 zero) and b_eff:(1,1).
    """
    s = w1.shape[1]
    w_eff = (w2 @ w1).reshape(-1).astype(jnp.float32)            # (S,)
    b_eff = (b1 @ w2.T + b2).reshape(1, 1).astype(jnp.float32)   # (1, 1)
    w8 = jnp.zeros((_SUBLANE, s), jnp.float32).at[0, :].set(w_eff)
    return w8, b_eff


def _dimension_semantics(num_tiles):
    """Batch axis semantics.  v7x has 2 TensorCores with per-TC HBM bandwidth;
    CORE_PARALLEL actually shards the grid across them (plain "parallel" has
    near-zero effect).  Only used when there are >=2 tiles to split."""
    if num_tiles >= 2:
        try:
            kind = jax.devices()[0].device_kind.lower()
        except Exception:
            kind = ""
        if "v7" in kind:
            return (pltpu.CORE_PARALLEL,)
    return ("parallel",)


def critic_x_forward(x, w8, b_eff, tb):
    b, s = x.shape
    grid = (pl.cdiv(b, tb),)   # ragged last tile allowed: reads clipped/garbage,
                               # writes clipped to the real extent.
    return pl.pallas_call(
        critic_x_kernel,
        out_shape=jax.ShapeDtypeStruct((1, b), jnp.float32),
        grid=grid,
        in_specs=[
            # x batch tile: last dim = full array dim (no 128-pad of S needed).
            pl.BlockSpec((tb, s), lambda i: (i, 0)),
            # folded weight: resident across the whole grid.
            pl.BlockSpec((_SUBLANE, s), lambda i: (0, 0)),
            # folded bias: scalar in SMEM (no VMEM tile, no vector load).
            pl.BlockSpec(memory_space=pltpu.MemorySpace.SMEM),
        ],
        out_specs=pl.BlockSpec((1, tb), lambda i: (0, i)),
        compiler_params=pltpu.CompilerParams(
            dimension_semantics=_dimension_semantics(grid[0]),
            vmem_limit_bytes=32 * 1024 * 1024,
        ),
    )(x, w8, b_eff)


def critic_x_apply(x, w8, b_eff):
    """x: (B, S) float32 -> (B, 1) float32, matching CriticX.forward."""
    b, s = x.shape
    assert s == w8.shape[1], (s, w8.shape)
    # Single tile when the whole batch fits (block dims == full array dims is
    # always legal); otherwise tile by _TB_MAX (multiple of 8 and 128) with a
    # ragged last block -- no batch padding, no extra HBM pass.
    tb = b if b <= _TB_MAX else _TB_MAX
    out = critic_x_forward(x, w8, b_eff, tb)      # (1, B) lane-dense row
    return out.reshape(b, 1)


def init_params(key, signal_shape=100, hidden=20):
    """PyTorch nn.Linear default init: uniform(-1/sqrt(fan_in), 1/sqrt(fan_in))."""
    k1, k2, k3, k4 = jax.random.split(key, 4)
    bound1 = 1.0 / jnp.sqrt(jnp.float32(signal_shape))
    bound2 = 1.0 / jnp.sqrt(jnp.float32(hidden))
    w1 = jax.random.uniform(k1, (hidden, signal_shape), jnp.float32, -bound1, bound1)
    b1 = jax.random.uniform(k2, (hidden,), jnp.float32, -bound1, bound1)
    w2 = jax.random.uniform(k3, (1, hidden), jnp.float32, -bound2, bound2)
    b2 = jax.random.uniform(k4, (1,), jnp.float32, -bound2, bound2)
    return w1, b1, w2, b2


if __name__ == "__main__":
    signal_shape = 100   # module default
    batch = 8

    key = jax.random.PRNGKey(0)
    kx, kp = jax.random.split(key)
    x = jax.random.normal(kx, (batch, signal_shape), jnp.float32)
    w1, b1, w2, b2 = init_params(kp, signal_shape=signal_shape, hidden=20)

    # Fold parameters once (outside the per-call path).
    w8, b_eff = fold_params(w1, b1, w2, b2)

    out = critic_x_apply(x, w8, b_eff)
    out = jax.block_until_ready(out)

    # Pure-JAX reference (same math as the PyTorch module).
    ref = (x @ w1.T + b1) @ w2.T + b2
    assert out.shape == (batch, 1), out.shape
    assert jnp.allclose(out, ref, atol=1e-4, rtol=1e-4), "mismatch vs reference"

    print("KERNEL_OK")
</pallas_src>

<mosaic_0001>
module attributes {stable_mosaic.version = 11 : i64} {
  func.func @critic_x_kernel(%arg0: i32, %arg1: memref<8x100xf32, #tpu.memory_space<vmem>>, %arg2: memref<8x100xf32, #tpu.memory_space<vmem>>, %arg3: memref<1x1xf32, #tpu.memory_space<smem>>, %arg4: memref<1x8xf32, #tpu.memory_space<vmem>>) attributes {dimension_semantics = [#tpu.dimension_semantics<parallel>], iteration_bounds = array<i64: 1>, scalar_prefetch = 0 : i64, scratch_operands = 0 : i64, tpu.core_type = #tpu.core_type<tc>, window_params = [{transform_indices = @transform_0, window_bounds = array<i64: 8, 100>}, {pipeline_mode = #tpu.pipeline_mode<synchronous>, transform_indices = @transform_1, window_bounds = array<i64: 8, 100>}, {transform_indices = @transform_2, window_bounds = array<i64: 1, 1>}, {transform_indices = @transform_3, window_bounds = array<i64: 1, 8>}]} {
    %c0 = arith.constant 0 : index
    %c0_0 = arith.constant 0 : index
    %0 = vector.load %arg2[%c0, %c0_0] : memref<8x100xf32, #tpu.memory_space<vmem>>, vector<8x100xf32>
    %c0_1 = arith.constant 0 : index
    %c0_2 = arith.constant 0 : index
    %1 = vector.load %arg1[%c0_1, %c0_2] : memref<8x100xf32, #tpu.memory_space<vmem>>, vector<8x100xf32>
    %cst = arith.constant dense<0.000000e+00> : vector<8x8xf32>
    %2 = tpu.matmul %0, %1, %cst {dimension_numbers = #tpu.dot_dimension_numbers<[1], [1], [0], [0], [0, 0, 1, 0], [], []>} : vector<8x100xf32>, vector<8x100xf32>, vector<8x8xf32> -> vector<8x8xf32>
    %3 = vector.extract_strided_slice %2 {offsets = [0, 0], sizes = [1, 8], strides = [1, 1]} : vector<8x8xf32> to vector<1x8xf32>
    %c0_3 = arith.constant 0 : index
    %c0_4 = arith.constant 0 : index
    %4 = memref.load %arg3[%c0_3, %c0_4] : memref<1x1xf32, #tpu.memory_space<smem>>
    %5 = vector.broadcast %4 : f32 to vector<1x8xf32>
    %6 = arith.addf %3, %5 : vector<1x8xf32>
    %c0_5 = arith.constant 0 : index
    %c0_6 = arith.constant 0 : index
    %7 = vector.load %arg4[%c0_5, %c0_6] : memref<1x8xf32, #tpu.memory_space<vmem>>, vector<1x8xf32>
    tpu.vector_store %arg4[%c0_5, %c0_6], %6 {strides = array<i32>} : memref<1x8xf32, #tpu.memory_space<vmem>>, vector<1x8xf32>,
    return
  }
  func.func @transform_0(%arg0: i32) -> (i32, i32) {
    %c0_i32 = arith.constant 0 : i32
    %c0_i32_0 = arith.constant 0 : i32
    return %arg0, %c0_i32 : i32, i32
  }
  func.func @transform_1(%arg0: i32) -> (i32, i32) {
    %c0_i32 = arith.constant 0 : i32
    %c0_i32_0 = arith.constant 0 : i32
    %c0_i32_1 = arith.constant 0 : i32
    return %c0_i32, %c0_i32_0 : i32, i32
  }
  func.func @transform_2(%arg0: i32) -> (i32, i32) {
    %c0_i32 = arith.constant 0 : i32
    %c0_i32_0 = arith.constant 0 : i32
    %c0_i32_1 = arith.constant 0 : i32
    return %c0_i32, %c0_i32_0 : i32, i32
  }
  func.func @transform_3(%arg0: i32) -> (i32, i32) {
    %c0_i32 = arith.constant 0 : i32
    %c0_i32_0 = arith.constant 0 : i32
    return %c0_i32, %arg0 : i32, i32
  }
}

</mosaic_0001>

<llo_original>
// kernel: tpu_custom_call.1
$region0: #{tpu_custom_call.1}
  #allocation0 [shape = 'u32[]', space=smem, size = 0x4, offset = 0x4, fixed_abs, tag = 'smem constant byte address 0x4 - core index']
  #allocation1 [shape = 'u32[144,128]{1,0:T(1,128)}', space=vmem, size = 0x12000, scoped, tag = 'internal scratch']
  #allocation2 [shape = 'f32[1,1]{1,0:T(1,128)S(6)}', space=smem, size = 0x200, scoped, tag = 'scoped memory for tpu_custom_call.1']
  %s0 = inlined_call_operand.hbm [shape: f32[8,100], index: 0, kind: input, shape index: {}]
  %s1 = inlined_call_operand.hbm [shape: f32[8,100], index: 1, kind: input, shape index: {}]
  %s2 = inlined_call_operand.<no memory space> [shape: f32[1,1], index: 2, kind: input, shape index: {}]
  %s3 = inlined_call_operand.hbm [shape: f32[1,8], index: 3, kind: output, shape index: {}]
  %s4 = sld [smem:[#allocation0]]
  $region30: #{tpu_custom_call.1} parent=0
    _
  %s6 = ssub.s32 1, %s4
  %s7 = scalar_select 0, %s6, %s4
  %8 = sst [smem:[#allocation2]] %s2
  $region1: #{tpu_custom_call.1} parent=0
    #allocation3 [shape = 'u8[4096]{0}', space=vmem, size = 0x1000, scoped, tag = 'input window, operand 0, single buffered']
    #allocation4 [shape = 's32[1]{0}', space=sflag, size = 0x4, scoped, tag = 'scoped memory for tpu_custom_call.1']
    #allocation5 [shape = 's32[1]{0}', space=sflag, size = 0x4, scoped, tag = 'scoped memory for tpu_custom_call.1']
    #allocation6 [shape = 'u8[4096]{0}', space=vmem, size = 0x1000, scoped, tag = 'input window, operand 1, single buffered']
    #allocation7 [shape = 's32[1]{0}', space=sflag, size = 0x4, scoped, tag = 'scoped memory for tpu_custom_call.1']
    #allocation8 [shape = 'u8[512]{0}', space=vmem, size = 0x400, scoped, tag = 'output window, operand 0, single buffered']
    %9 = vsyncpa [#allocation4], 0
    %10 = vsyncpa [#allocation7], 0
    %11 = vsyncpa [#allocation5], 0
    // Predicated region
    $region2: #{tpu_custom_call.1} parent=1 // pred_check
      _
    $region3: #{tpu_custom_call.1} parent=1 // pred_check_branch
      %13 = sbr.rel (0) target = $region5
    $region4: #{tpu_custom_call.1} parent=1 // pred_region
      %s15 = ssub.s32 128, 128
      %16 = vsyncadd [#allocation4], %s15
      %s18 = sshll.u32 [#allocation3], 4
      %s19 = int_to_ptr.vmem [resolvable:$true] %s18
      %21 = dma.hbm_to_vmem [thread:$0]  %s0, 128, %s19, [#allocation4]
    $region5: #{tpu_custom_call.1} parent=1 // pred_fallthru
      _
    // Predicated region
    $region6: #{tpu_custom_call.1} parent=1 // pred_check
      _
    $region7: #{tpu_custom_call.1} parent=1 // pred_check_branch
      %23 = sbr.rel (0) target = $region9
    $region8: #{tpu_custom_call.1} parent=1 // pred_region
      %s25 = ssub.s32 128, 128
      %26 = vsyncadd [#allocation7], %s25
      %s28 = sshll.u32 [#allocation6], 4
      %s29 = int_to_ptr.vmem [resolvable:$true] %s28
      %31 = dma.hbm_to_vmem [thread:$0]  %s1, 128, %s29, [#allocation7]
    $region9: #{tpu_custom_call.1} parent=1 // pred_fallthru
      _
    // Predicated region
    $region10: #{tpu_custom_call.1} parent=1 // pred_check
      _
    $region11: #{tpu_custom_call.1} parent=1 // pred_check_branch
      %33 = sbr.rel (0) target = $region13
    $region12: #{tpu_custom_call.1} parent=1 // pred_region
      _
    $region13: #{tpu_custom_call.1} parent=1 // pred_fallthru
      _
    // Predicated region
    $region14: #{tpu_custom_call.1} parent=1 // pred_check
      _
    $region15: #{tpu_custom_call.1} parent=1 // pred_check_branch
      %35 = sbr.rel (0) target = $region17
    $region16: #{tpu_custom_call.1} parent=1 // pred_region
      %36 = dma.done [#allocation4], 128
    $region17: #{tpu_custom_call.1} parent=1 // pred_fallthru
      _
    // Predicated region
    $region18: #{tpu_custom_call.1} parent=1 // pred_check
      _
    $region19: #{tpu_custom_call.1} parent=1 // pred_check_branch
      %38 = sbr.rel (0) target = $region21
    $region20: #{tpu_custom_call.1} parent=1 // pred_region
      %39 = dma.done [#allocation7], 128
    $region21: #{tpu_custom_call.1} parent=1 // pred_fallthru
      _
    %v40 = vld [vmem:[#allocation6] sm:$0xff]
    %v41 = vld [vmem:[#allocation3] sm:$0xff]
    %vm42 = vcmask 818176
    %v44 = vsel %vm42, %v40, 0
    %v47 = vsel %vm42, %v41, 0
    %49 = vmatprep.subr.mxu0 0.0
    %50 = vmatpush1.xpose.msra.mxu0 %v47
    %51 = vmatprep.subr.mxu0 0.0
    %52 = vmatpush1.xpose.msra.mxu0 0.0
    %53 = vmatprep.subr.mxu0 0.0
    %54 = vmatpush1.xpose.msra.mxu0 0.0
    %55 = vmatprep.subr.mxu0 0.0
    %56 = vmatpush1.xpose.msra.mxu0 0.0
    %57 = vmatprep.subr.mxu0 0.0
    %58 = vmatpush1.xpose.msra.mxu0 0.0
    %59 = vmatprep.subr.mxu0 0.0
    %60 = vmatpush1.xpose.msra.mxu0 0.0
    %61 = vmatprep.subr.mxu0 0.0
    %62 = vmatpush1.xpose.msra.mxu0 0.0
    %63 = vmatprep.subr.mxu0 0.0
    %64 = vmatpush1.xpose.msra.mxu0 0.0
    %65 = vmatprep.subr.mxu0 0.0
    %66 = vmatpush1.xpose.msra.mxu0 0.0
    %67 = vmatprep.subr.mxu0 0.0
    %68 = vmatpush1.xpose.msra.mxu0 0.0
    %69 = vmatprep.subr.mxu0 0.0
    %70 = vmatpush1.xpose.msra.mxu0 0.0
    %71 = vmatprep.subr.mxu0 0.0
    %72 = vmatpush1.xpose.msra.mxu0 0.0
    %73 = vmatprep.subr.mxu0 0.0
    %74 = vmatpush1.xpose.msra.mxu0 0.0
    %75 = vmatprep.subr.mxu0 0.0
    %76 = vmatpush1.xpose.msra.mxu0 0.0
    %77 = vmatprep.subr.mxu0 0.0
    %78 = vmatpush1.xpose.msra.mxu0 0.0
    %79 = vmatprep.subr.mxu0 0.0
    %80 = vmatpush1.xpose.msra.mxu0 0.0
    %81 = vmatprep.subr.mxu0 0.0
    %82 = vmatpush1.xpose.msra.mxu0 0.0
    %83 = vmatprep.subr.mxu0 0.0
    %84 = vmatpush1.xpose.msra.mxu0 0.0
    %85 = vmatprep.subr.mxu0 0.0
    %86 = vmatpush1.xpose.msra.mxu0 0.0
    %87 = vmatprep.subr.mxu0 0.0
    %88 = vmatpush1.xpose.msra.mxu0 0.0
    %89 = vmatprep.subr.mxu0 0.0
    %90 = vmatpush1.xpose.msra.mxu0 0.0
    %91 = vmatprep.subr.mxu0 0.0
    %92 = vmatpush1.xpose.msra.mxu0 0.0
    %93 = vmatprep.subr.mxu0 0.0
    %94 = vmatpush1.xpose.msra.mxu0 0.0
    %95 = vmatprep.subr.mxu0 0.0
    %96 = vmatpush1.xpose.msra.mxu0 0.0
    %97 = vmatprep.subr.mxu0 0.0
    %98 = vmatpush1.xpose.msra.mxu0 0.0
    %99 = vmatprep.subr.mxu0 0.0
    %100 = vmatpush1.xpose.msra.mxu0 0.0
    %101 = vmatprep.subr.mxu0 0.0
    %102 = vmatpush1.xpose.msra.mxu0 0.0
    %103 = vmatprep.subr.mxu0 0.0
    %104 = vmatpush1.xpose.msra.mxu0 0.0
    %105 = vmatprep.subr.mxu0 0.0
    %106 = vmatpush1.xpose.msra.mxu0 0.0
    %107 = vmatprep.subr.mxu0 0.0
    %108 = vmatpush1.xpose.msra.mxu0 0.0
    %109 = vmatprep.subr.mxu0 0.0
    %110 = vmatpush1.xpose.msra.mxu0 0.0
    %111 = vmatprep.subr.mxu0 0.0
    %112 = vmatpush1.xpose.msra.mxu0 0.0
    %113 = vmatprep.mubr.f32.mxu0 0.0
    %114 = vmatmul.mubr.f32.gmra.mrb[0].mxu0 %v44
    %v115 = vpop.f32.mrb[0].mxu0
    %v116 = vadd.f32 0.0, %v115
    %v117 = vpop.f32.mrb[0].mxu0
    %118 = vdwg.mxu0
    %s119 = sld [smem:[#allocation2]]
    %v120 = vstv %s119
    %v121 = vadd.f32 %v116, %v120
    %vm122 = vcmask 57344
    %123 = vst.msk [vmem:[#allocation8] sm:$0x1] %vm122, %v121
    // Predicated region
    $region22: #{tpu_custom_call.1} parent=1 // pred_check
      _
    $region23: #{tpu_custom_call.1} parent=1 // pred_check_branch
      %125 = sbr.rel (0) target = $region25
    $region24: #{tpu_custom_call.1} parent=1 // pred_region
      %s127 = ssub.s32 16, 16
      %128 = vsyncadd [#allocation5], %s127
      %s130 = sshll.u32 [#allocation8], 4
      %s131 = int_to_ptr.vmem [resolvable:$true] %s130
      %133 = dma.vmem_to_hbm [thread:$0]  %s131, 16, %s3, [#allocation5]
    $region25: #{tpu_custom_call.1} parent=1 // pred_fallthru
      _
    // Predicated region
    $region26: #{tpu_custom_call.1} parent=1 // pred_check
      _
    $region27: #{tpu_custom_call.1} parent=1 // pred_check_branch
      %135 = sbr.rel (0) target = $region29
    $region28: #{tpu_custom_call.1} parent=1 // pred_region
      %136 = dma.done [#allocation5], 16
    $region29: #{tpu_custom_call.1} parent=1 // pred_fallthru
      _
    %137 = vsyncpa [#allocation4], 1
    %138 = vsyncpa [#allocation7], 1
    %139 = vsyncpa [#allocation5], 1

</llo_original>
